<compile_context>
chip_gen: v5e
topology: v5e:2x2
jax: 0.10.0
libtpu: 0.0.40
codegen_flags: <defaults>
</compile_context>

<pallas_src>
import functools

import jax
import jax.numpy as jnp
from jax import lax
from jax.experimental import pallas as pl
from jax.experimental.pallas import tpu as pltpu

# Module constants (from charLevel.py)
n_embd = 384
block_size = 128
dropout_p = 0.3


def head_kernel(x_ref, wqkv_ref, *rest, head_size, training):
    # x_ref:    (BB, T, C)   input block (BB batches per grid step)
    # wqkv_ref: (C, 3H)      fused [query | key | value] weights (transposed)
    # rest:     (drop_ref, out_ref) if training else (out_ref,)
    out_ref = rest[-1]
    H = head_size
    BB, T, C = x_ref.shape

    # ---- Fused QKV projection: one (BB*T, C) @ (C, 3H) matmul, bf16 -> f32 acc.
    xb = x_ref[...].reshape(BB * T, C).astype(jnp.bfloat16)
    w = wqkv_ref[...].astype(jnp.bfloat16)
    qkv = jnp.dot(xb, w, preferred_element_type=jnp.float32).reshape(BB, T, 3 * H)

    q = qkv[:, :, 0 * H:1 * H].astype(jnp.bfloat16)
    k = qkv[:, :, 1 * H:2 * H].astype(jnp.bfloat16)
    v = qkv[:, :, 2 * H:3 * H].astype(jnp.bfloat16)

    # ---- Scaled causal attention scores: contract head dim, no explicit k^T.
    scale = H ** (-0.5)
    s = jnp.einsum('btd,bsd->bts', q, k,
                   preferred_element_type=jnp.float32) * scale      # (BB, T, T)

    row = lax.broadcasted_iota(jnp.int32, (T, T), 0)
    col = lax.broadcasted_iota(jnp.int32, (T, T), 1)
    s = jnp.where(col <= row, s, -jnp.inf)                           # causal mask

    # ---- Numerically stable softmax (kept in f32 on the VPU/EUP).
    s = s - jnp.max(s, axis=-1, keepdims=True)
    e = jnp.exp(s)
    wei = e / jnp.sum(e, axis=-1, keepdims=True)

    if training:
        # Inverted dropout: keep with prob (1 - p); the 1/(1-p) scale is folded
        # into the (T, H) output below instead of the (T, T) weights.
        drop_ref = rest[0]
        keep = drop_ref[...] >= dropout_p
        wei = jnp.where(keep, wei, 0.0)

    out = jnp.einsum('bts,bsd->btd', wei.astype(jnp.bfloat16), v,
                     preferred_element_type=jnp.float32)             # (BB, T, H)
    if training:
        out = out * (1.0 / (1.0 - dropout_p))

    out_ref[...] = out.astype(out_ref.dtype)


def _pick_block_b(B, max_bb=8):
    """Largest divisor of B that is <= max_bb (batches processed per grid step)."""
    bb = 1
    for cand in range(1, min(B, max_bb) + 1):
        if B % cand == 0:
            bb = cand
    return bb


def head_forward(x, w_key, w_query, w_value, *, dropout_key=None, training=True,
                 block_b=None):
    """x: (B, T, C); w_*: torch-style (head_size, n_embd) Linear weights (no bias)."""
    B, T, C = x.shape
    H = w_key.shape[0]
    assert C == n_embd and T <= block_size

    bb = block_b if block_b is not None else _pick_block_b(B)
    assert B % bb == 0, "block_b must divide the batch size"

    # Fused, transposed QKV weight: (C, 3H), ordered [query | key | value].
    w_qkv = jnp.concatenate([w_query.T, w_key.T, w_value.T], axis=1)

    kernel = functools.partial(head_kernel, head_size=H, training=training)

    in_specs = [
        pl.BlockSpec((bb, T, C), lambda b: (b, 0, 0)),
        pl.BlockSpec((C, 3 * H), lambda b: (0, 0)),
    ]
    inputs = [x, w_qkv]

    if training:
        if dropout_key is None:
            dropout_key = jax.random.PRNGKey(0)
        # Host-side dropout randomness (portable: no TPU-only PRNG primitives
        # inside the kernel, so interpret mode and hardware both work).
        drop_u = jax.random.uniform(dropout_key, (B, T, T), jnp.float32)
        in_specs.append(pl.BlockSpec((bb, T, T), lambda b: (b, 0, 0)))
        inputs.append(drop_u)

    return pl.pallas_call(
        kernel,
        out_shape=jax.ShapeDtypeStruct((B, T, H), x.dtype),
        grid=(B // bb,),
        in_specs=in_specs,
        out_specs=pl.BlockSpec((bb, T, H), lambda b: (b, 0, 0)),
        compiler_params=pltpu.CompilerParams(
            dimension_semantics=("parallel",)),
    )(*inputs)


if __name__ == "__main__":
    # Small, module-consistent shapes: B=2, T=16 (<= block_size), C=n_embd=384,
    # head_size=64.
    B, T, C, H = 2, 16, n_embd, 64

    key = jax.random.PRNGKey(0)
    kx, kk, kq, kv, kd = jax.random.split(key, 5)

    x = jax.random.normal(kx, (B, T, C), dtype=jnp.float32)
    # Deterministic init of the three bias-free Linear layers (torch layout (out, in)).
    bound = 1.0 / (C ** 0.5)
    w_key = jax.random.uniform(kk, (H, C), jnp.float32, -bound, bound)
    w_query = jax.random.uniform(kq, (H, C), jnp.float32, -bound, bound)
    w_value = jax.random.uniform(kv, (H, C), jnp.float32, -bound, bound)

    out = head_forward(x, w_key, w_query, w_value, dropout_key=kd, training=True)
    jax.block_until_ready(out)
    assert out.shape == (B, T, H)
    assert bool(jnp.all(jnp.isfinite(out)))
    print("KERNEL_OK")
</pallas_src>

<mosaic_0001>
module attributes {stable_mosaic.version = 11 : i64} {
  func.func @head_kernel(%arg0: i32, %arg1: memref<2x16x384xf32, #tpu.memory_space<vmem>>, %arg2: memref<384x192xf32, #tpu.memory_space<vmem>>, %arg3: memref<2x16x16xf32, #tpu.memory_space<vmem>>, %arg4: memref<2x16x64xf32, #tpu.memory_space<vmem>>) attributes {dimension_semantics = [#tpu.dimension_semantics<parallel>], iteration_bounds = array<i64: 1>, scalar_prefetch = 0 : i64, scratch_operands = 0 : i64, tpu.core_type = #tpu.core_type<tc>, window_params = [{transform_indices = @transform_0, window_bounds = array<i64: 2, 16, 384>}, {pipeline_mode = #tpu.pipeline_mode<synchronous>, transform_indices = @transform_1, window_bounds = array<i64: 384, 192>}, {transform_indices = @transform_2, window_bounds = array<i64: 2, 16, 16>}, {transform_indices = @transform_3, window_bounds = array<i64: 2, 16, 64>}]} {
    %c0 = arith.constant 0 : index
    %c0_0 = arith.constant 0 : index
    %c0_1 = arith.constant 0 : index
    %0 = vector.load %arg1[%c0, %c0_0, %c0_1] : memref<2x16x384xf32, #tpu.memory_space<vmem>>, vector<2x16x384xf32>
    %1 = vector.shape_cast %0 : vector<2x16x384xf32> to vector<32x384xf32>
    %2 = arith.truncf %1 : vector<32x384xf32> to vector<32x384xbf16>
    %c0_2 = arith.constant 0 : index
    %c0_3 = arith.constant 0 : index
    %3 = vector.load %arg2[%c0_2, %c0_3] : memref<384x192xf32, #tpu.memory_space<vmem>>, vector<384x192xf32>
    %4 = arith.truncf %3 : vector<384x192xf32> to vector<384x192xbf16>
    %cst = arith.constant dense<0.000000e+00> : vector<32x192xf32>
    %5 = tpu.matmul %2, %4, %cst {dimension_numbers = #tpu.dot_dimension_numbers<[1], [0], [0], [1], [0, 0, 1, 1], [], []>} : vector<32x384xbf16>, vector<384x192xbf16>, vector<32x192xf32> -> vector<32x192xf32>
    %6 = vector.shape_cast %5 : vector<32x192xf32> to vector<2x16x192xf32>
    %7 = vector.extract_strided_slice %6 {offsets = [0, 0, 0], sizes = [2, 16, 64], strides = [1, 1, 1]} : vector<2x16x192xf32> to vector<2x16x64xf32>
    %8 = arith.truncf %7 : vector<2x16x64xf32> to vector<2x16x64xbf16>
    %9 = vector.extract_strided_slice %6 {offsets = [0, 0, 64], sizes = [2, 16, 64], strides = [1, 1, 1]} : vector<2x16x192xf32> to vector<2x16x64xf32>
    %10 = arith.truncf %9 : vector<2x16x64xf32> to vector<2x16x64xbf16>
    %11 = vector.extract_strided_slice %6 {offsets = [0, 0, 128], sizes = [2, 16, 64], strides = [1, 1, 1]} : vector<2x16x192xf32> to vector<2x16x64xf32>
    %12 = arith.truncf %11 : vector<2x16x64xf32> to vector<2x16x64xbf16>
    "tpu.trace_start"() <{level = 10 : i32, message = "btd,bsd->bts"}> : () -> ()
    %cst_4 = arith.constant dense<0.000000e+00> : vector<2x16x16xf32>
    %13 = tpu.matmul %8, %10, %cst_4 {dimension_numbers = #tpu.dot_dimension_numbers<[2], [2], [1], [1], [0, 0, 0, 1, 1, 1], [0], [0]>} : vector<2x16x64xbf16>, vector<2x16x64xbf16>, vector<2x16x16xf32> -> vector<2x16x16xf32>
    "tpu.trace_stop"() : () -> ()
    %cst_5 = arith.constant 1.250000e-01 : f32
    %14 = vector.broadcast %cst_5 : f32 to vector<2x16x16xf32>
    %15 = arith.mulf %13, %14 : vector<2x16x16xf32>
    %16 = tpu.iota {dimensions = array<i32: 0>} : vector<16x16xi32>
    %17 = tpu.iota {dimensions = array<i32: 1>} : vector<16x16xi32>
    %18 = arith.cmpi sle, %17, %16 : vector<16x16xi32>
    %cst_6 = arith.constant 0xFF800000 : f32
    %19 = vector.shape_cast %18 : vector<16x16xi1> to vector<1x16x16xi1>
    %20 = vector.broadcast %19 : vector<1x16x16xi1> to vector<2x16x16xi1>
    %21 = vector.broadcast %cst_6 : f32 to vector<2x16x16xf32>
    %22 = arith.select %20, %15, %21 : vector<2x16x16xi1>, vector<2x16x16xf32>
    %cst_7 = arith.constant dense<0xFF800000> : vector<2x16xf32>
    %23 = vector.multi_reduction <maximumf>, %22, %cst_7 [2] : vector<2x16x16xf32> to vector<2x16xf32>
    %24 = vector.shape_cast %23 : vector<2x16xf32> to vector<2x16x1xf32>
    %25 = vector.broadcast %24 : vector<2x16x1xf32> to vector<2x16x16xf32>
    %26 = arith.subf %22, %25 : vector<2x16x16xf32>
    %27 = math.exp %26 : vector<2x16x16xf32>
    %cst_8 = arith.constant dense<0.000000e+00> : vector<2x16xf32>
    %28 = vector.multi_reduction <add>, %27, %cst_8 [2] : vector<2x16x16xf32> to vector<2x16xf32>
    %29 = vector.shape_cast %28 : vector<2x16xf32> to vector<2x16x1xf32>
    %30 = vector.broadcast %29 : vector<2x16x1xf32> to vector<2x16x16xf32>
    %31 = arith.divf %27, %30 : vector<2x16x16xf32>
    %c0_9 = arith.constant 0 : index
    %c0_10 = arith.constant 0 : index
    %c0_11 = arith.constant 0 : index
    %32 = vector.load %arg3[%c0_9, %c0_10, %c0_11] : memref<2x16x16xf32, #tpu.memory_space<vmem>>, vector<2x16x16xf32>
    %cst_12 = arith.constant 3.000000e-01 : f32
    %33 = vector.broadcast %cst_12 : f32 to vector<2x16x16xf32>
    %34 = arith.cmpf oge, %32, %33 : vector<2x16x16xf32>
    %cst_13 = arith.constant 0.000000e+00 : f32
    %35 = vector.broadcast %cst_13 : f32 to vector<2x16x16xf32>
    %36 = arith.select %34, %31, %35 : vector<2x16x16xi1>, vector<2x16x16xf32>
    %37 = arith.truncf %36 : vector<2x16x16xf32> to vector<2x16x16xbf16>
    "tpu.trace_start"() <{level = 10 : i32, message = "bts,bsd->btd"}> : () -> ()
    %cst_14 = arith.constant dense<0.000000e+00> : vector<2x16x64xf32>
    %38 = tpu.matmul %37, %12, %cst_14 {dimension_numbers = #tpu.dot_dimension_numbers<[2], [1], [1], [2], [0, 0, 0, 1, 1, 2], [0], [0]>} : vector<2x16x16xbf16>, vector<2x16x64xbf16>, vector<2x16x64xf32> -> vector<2x16x64xf32>
    "tpu.trace_stop"() : () -> ()
    %cst_15 = arith.constant 1.42857146 : f32
    %39 = vector.broadcast %cst_15 : f32 to vector<2x16x64xf32>
    %40 = arith.mulf %38, %39 : vector<2x16x64xf32>
    %c0_16 = arith.constant 0 : index
    %c0_17 = arith.constant 0 : index
    %c0_18 = arith.constant 0 : index
    %41 = vector.load %arg4[%c0_16, %c0_17, %c0_18] : memref<2x16x64xf32, #tpu.memory_space<vmem>>, vector<2x16x64xf32>
    tpu.vector_store %arg4[%c0_16, %c0_17, %c0_18], %40 {strides = array<i32>} : memref<2x16x64xf32, #tpu.memory_space<vmem>>, vector<2x16x64xf32>,
    return
  }
  func.func @transform_0(%arg0: i32) -> (i32, i32, i32) {
    %c0_i32 = arith.constant 0 : i32
    %c0_i32_0 = arith.constant 0 : i32
    %c0_i32_1 = arith.constant 0 : i32
    return %arg0, %c0_i32, %c0_i32_0 : i32, i32, i32
  }
  func.func @transform_1(%arg0: i32) -> (i32, i32) {
    %c0_i32 = arith.constant 0 : i32
    %c0_i32_0 = arith.constant 0 : i32
    %c0_i32_1 = arith.constant 0 : i32
    return %c0_i32, %c0_i32_0 : i32, i32
  }
  func.func @transform_2(%arg0: i32) -> (i32, i32, i32) {
    %c0_i32 = arith.constant 0 : i32
    %c0_i32_0 = arith.constant 0 : i32
    %c0_i32_1 = arith.constant 0 : i32
    return %arg0, %c0_i32, %c0_i32_0 : i32, i32, i32
  }
  func.func @transform_3(%arg0: i32) -> (i32, i32, i32) {
    %c0_i32 = arith.constant 0 : i32
    %c0_i32_0 = arith.constant 0 : i32
    %c0_i32_1 = arith.constant 0 : i32
    return %arg0, %c0_i32, %c0_i32_0 : i32, i32, i32
  }
}

</mosaic_0001>

<llo_original>
// kernel: tpu_custom_call.1
$region0: #{tpu_custom_call.1}
  #allocation0 [shape = 'u32[]', space=smem, size = 0x4, offset = 0x4, fixed_abs, tag = 'smem constant byte address 0x4 - core index']
  #allocation1 [shape = 'u32[72,128]{1,0:T(1,128)}', space=vmem, size = 0x9000, scoped, tag = 'internal scratch']
  %s0 = inlined_call_operand.vmem [shape: f32[2,16,384], index: 0, kind: input, shape index: {}]
  %s1 = inlined_call_operand.vmem [shape: f32[384,192], index: 1, kind: input, shape index: {}]
  %s2 = inlined_call_operand.vmem [shape: f32[2,16,16], index: 2, kind: input, shape index: {}]
  %s3 = inlined_call_operand.hbm [shape: f32[2,16,64], index: 3, kind: output, shape index: {}]
  %s4 = sld [smem:[#allocation0]]
  $region22: #{tpu_custom_call.1} parent=0
    _
  %s6 = ssub.s32 1, %s4
  %s7 = scalar_select 0, %s6, %s4
  $region1: #{tpu_custom_call.1} parent=0
    #allocation2 [shape = 'u8[16384]{0}', space=vmem, size = 0x4000, scoped, tag = 'output window, operand 0, single buffered']
    #allocation3 [shape = 's32[1]{0}', space=sflag, size = 0x4, scoped, tag = 'scoped memory for tpu_custom_call.1']
    %8 = vsyncpa [#allocation3], 0
    // Predicated region
    $region2: #{tpu_custom_call.1} parent=1 // pred_check
      _
    $region3: #{tpu_custom_call.1} parent=1 // pred_check_branch
      %10 = sbr.rel (0) target = $region5
    $region4: #{tpu_custom_call.1} parent=1 // pred_region
      _
    $region5: #{tpu_custom_call.1} parent=1 // pred_fallthru
      _
    // Predicated region
    $region6: #{tpu_custom_call.1} parent=1 // pred_check
      _
    $region7: #{tpu_custom_call.1} parent=1 // pred_check_branch
      %12 = sbr.rel (0) target = $region9
    $region8: #{tpu_custom_call.1} parent=1 // pred_region
      _
    $region9: #{tpu_custom_call.1} parent=1 // pred_fallthru
      _
    // Predicated region
    $region10: #{tpu_custom_call.1} parent=1 // pred_check
      _
    $region11: #{tpu_custom_call.1} parent=1 // pred_check_branch
      %14 = sbr.rel (0) target = $region13
    $region12: #{tpu_custom_call.1} parent=1 // pred_region
      _
    $region13: #{tpu_custom_call.1} parent=1 // pred_fallthru
      _
    %v16 = vld [vmem:[%s0] sm:$0xff]
    %v17 = vld [vmem:[%s0 + $0x8] sm:$0xff]
    %v18 = vld [vmem:[%s0 + $0x10] sm:$0xff]
    %v19 = vld [vmem:[%s0 + $0x18] sm:$0xff]
    %v20 = vld [vmem:[%s0 + $0x20] sm:$0xff]
    %v21 = vld [vmem:[%s0 + $0x28] sm:$0xff]
    %v22 = vld [vmem:[%s0 + $0x30] sm:$0xff]
    %v23 = vld [vmem:[%s0 + $0x38] sm:$0xff]
    %v24 = vld [vmem:[%s0 + $0x40] sm:$0xff]
    %v25 = vld [vmem:[%s0 + $0x48] sm:$0xff]
    %v26 = vld [vmem:[%s0 + $0x50] sm:$0xff]
    %v27 = vld [vmem:[%s0 + $0x58] sm:$0xff]
    %v28 = vpack.c.bf16 %v19, %v16
    %v29 = vpack.c.bf16 %v20, %v17
    %v30 = vpack.c.bf16 %v21, %v18
    %v31 = vpack.c.bf16 %v25, %v22
    %v32 = vpack.c.bf16 %v26, %v23
    %v33 = vpack.c.bf16 %v27, %v24
    %v34 = vld [vmem:[%s1] sm:$0xff]
    %v35 = vld [vmem:[%s1 + $0x8] sm:$0xff]
    %v36 = vld [vmem:[%s1 + $0x10] sm:$0xff]
    %v37 = vld [vmem:[%s1 + $0x18] sm:$0xff]
    %v38 = vld [vmem:[%s1 + $0x20] sm:$0xff]
    %v39 = vld [vmem:[%s1 + $0x28] sm:$0xff]
    %v40 = vld [vmem:[%s1 + $0x30] sm:$0xff]
    %v41 = vld [vmem:[%s1 + $0x38] sm:$0xff]
    %v42 = vld [vmem:[%s1 + $0x40] sm:$0xff]
    %v43 = vld [vmem:[%s1 + $0x48] sm:$0xff]
    %v44 = vld [vmem:[%s1 + $0x50] sm:$0xff]
    %v45 = vld [vmem:[%s1 + $0x58] sm:$0xff]
    %v46 = vld [vmem:[%s1 + $0x60] sm:$0xff]
    %v47 = vld [vmem:[%s1 + $0x68] sm:$0xff]
    %v48 = vld [vmem:[%s1 + $0x70] sm:$0xff]
    %v49 = vld [vmem:[%s1 + $0x78] sm:$0xff]
    %v50 = vld [vmem:[%s1 + $0x80] sm:$0xff]
    %v51 = vld [vmem:[%s1 + $0x88] sm:$0xff]
    %v52 = vld [vmem:[%s1 + $0x90] sm:$0xff]
    %v53 = vld [vmem:[%s1 + $0x98] sm:$0xff]
    %v54 = vld [vmem:[%s1 + $0xa0] sm:$0xff]
    %v55 = vld [vmem:[%s1 + $0xa8] sm:$0xff]
    %v56 = vld [vmem:[%s1 + $0xb0] sm:$0xff]
    %v57 = vld [vmem:[%s1 + $0xb8] sm:$0xff]
    %v58 = vld [vmem:[%s1 + $0xc0] sm:$0xff]
    %v59 = vld [vmem:[%s1 + $0xc8] sm:$0xff]
    %v60 = vld [vmem:[%s1 + $0xd0] sm:$0xff]
    %v61 = vld [vmem:[%s1 + $0xd8] sm:$0xff]
    %v62 = vld [vmem:[%s1 + $0xe0] sm:$0xff]
    %v63 = vld [vmem:[%s1 + $0xe8] sm:$0xff]
    %v64 = vld [vmem:[%s1 + $0xf0] sm:$0xff]
    %v65 = vld [vmem:[%s1 + $0xf8] sm:$0xff]
    %v66 = vld [vmem:[%s1 + $0x100] sm:$0xff]
    %v67 = vld [vmem:[%s1 + $0x108] sm:$0xff]
    %v68 = vld [vmem:[%s1 + $0x110] sm:$0xff]
    %v69 = vld [vmem:[%s1 + $0x118] sm:$0xff]
    %v70 = vld [vmem:[%s1 + $0x120] sm:$0xff]
    %v71 = vld [vmem:[%s1 + $0x128] sm:$0xff]
    %v72 = vld [vmem:[%s1 + $0x130] sm:$0xff]
    %v73 = vld [vmem:[%s1 + $0x138] sm:$0xff]
    %v74 = vld [vmem:[%s1 + $0x140] sm:$0xff]
    %v75 = vld [vmem:[%s1 + $0x148] sm:$0xff]
    %v76 = vld [vmem:[%s1 + $0x150] sm:$0xff]
    %v77 = vld [vmem:[%s1 + $0x158] sm:$0xff]
    %v78 = vld [vmem:[%s1 + $0x160] sm:$0xff]
    %v79 = vld [vmem:[%s1 + $0x168] sm:$0xff]
    %v80 = vld [vmem:[%s1 + $0x170] sm:$0xff]
    %v81 = vld [vmem:[%s1 + $0x178] sm:$0xff]
    %v82 = vld [vmem:[%s1 + $0x180] sm:$0xff]
    %v83 = vld [vmem:[%s1 + $0x188] sm:$0xff]
    %v84 = vld [vmem:[%s1 + $0x190] sm:$0xff]
    %v85 = vld [vmem:[%s1 + $0x198] sm:$0xff]
    %v86 = vld [vmem:[%s1 + $0x1a0] sm:$0xff]
    %v87 = vld [vmem:[%s1 + $0x1a8] sm:$0xff]
    %v88 = vld [vmem:[%s1 + $0x1b0] sm:$0xff]
    %v89 = vld [vmem:[%s1 + $0x1b8] sm:$0xff]
    %v90 = vld [vmem:[%s1 + $0x1c0] sm:$0xff]
    %v91 = vld [vmem:[%s1 + $0x1c8] sm:$0xff]
    %v92 = vld [vmem:[%s1 + $0x1d0] sm:$0xff]
    %v93 = vld [vmem:[%s1 + $0x1d8] sm:$0xff]
    %v94 = vld [vmem:[%s1 + $0x1e0] sm:$0xff]
    %v95 = vld [vmem:[%s1 + $0x1e8] sm:$0xff]
    %v96 = vld [vmem:[%s1 + $0x1f0] sm:$0xff]
    %v97 = vld [vmem:[%s1 + $0x1f8] sm:$0xff]
    %v98 = vld [vmem:[%s1 + $0x200] sm:$0xff]
    %v99 = vld [vmem:[%s1 + $0x208] sm:$0xff]
    %v100 = vld [vmem:[%s1 + $0x210] sm:$0xff]
    %v101 = vld [vmem:[%s1 + $0x218] sm:$0xff]
    %v102 = vld [vmem:[%s1 + $0x220] sm:$0xff]
    %v103 = vld [vmem:[%s1 + $0x228] sm:$0xff]
    %v104 = vld [vmem:[%s1 + $0x230] sm:$0xff]
    %v105 = vld [vmem:[%s1 + $0x238] sm:$0xff]
    %v106 = vld [vmem:[%s1 + $0x240] sm:$0xff]
    %v107 = vld [vmem:[%s1 + $0x248] sm:$0xff]
    %v108 = vld [vmem:[%s1 + $0x250] sm:$0xff]
    %v109 = vld [vmem:[%s1 + $0x258] sm:$0xff]
    %v110 = vld [vmem:[%s1 + $0x260] sm:$0xff]
    %v111 = vld [vmem:[%s1 + $0x268] sm:$0xff]
    %v112 = vld [vmem:[%s1 + $0x270] sm:$0xff]
    %v113 = vld [vmem:[%s1 + $0x278] sm:$0xff]
    %v114 = vld [vmem:[%s1 + $0x280] sm:$0xff]
    %v115 = vld [vmem:[%s1 + $0x288] sm:$0xff]
    %v116 = vld [vmem:[%s1 + $0x290] sm:$0xff]
    %v117 = vld [vmem:[%s1 + $0x298] sm:$0xff]
    %v118 = vld [vmem:[%s1 + $0x2a0] sm:$0xff]
    %v119 = vld [vmem:[%s1 + $0x2a8] sm:$0xff]
    %v120 = vld [vmem:[%s1 + $0x2b0] sm:$0xff]
    %v121 = vld [vmem:[%s1 + $0x2b8] sm:$0xff]
    %v122 = vld [vmem:[%s1 + $0x2c0] sm:$0xff]
    %v123 = vld [vmem:[%s1 + $0x2c8] sm:$0xff]
    %v124 = vld [vmem:[%s1 + $0x2d0] sm:$0xff]
    %v125 = vld [vmem:[%s1 + $0x2d8] sm:$0xff]
    %v126 = vld [vmem:[%s1 + $0x2e0] sm:$0xff]
    %v127 = vld [vmem:[%s1 + $0x2e8] sm:$0xff]
    %v128 = vld [vmem:[%s1 + $0x2f0] sm:$0xff]
    %v129 = vld [vmem:[%s1 + $0x2f8] sm:$0xff]
    %v130 = vpack.c.bf16 %v36, %v34
    %v131 = vpack.c.bf16 %v37, %v35
    %v132 = vpack.c.bf16 %v40, %v38
    %v133 = vpack.c.bf16 %v41, %v39
    %v134 = vpack.c.bf16 %v44, %v42
    %v135 = vpack.c.bf16 %v45, %v43
    %v136 = vpack.c.bf16 %v48, %v46
    %v137 = vpack.c.bf16 %v49, %v47
    %v138 = vpack.c.bf16 %v52, %v50
    %v139 = vpack.c.bf16 %v53, %v51
    %v140 = vpack.c.bf16 %v56, %v54
    %v141 = vpack.c.bf16 %v57, %v55
    %v142 = vpack.c.bf16 %v60, %v58
    %v143 = vpack.c.bf16 %v61, %v59
    %v144 = vpack.c.bf16 %v64, %v62
    %v145 = vpack.c.bf16 %v65, %v63
    %v146 = vpack.c.bf16 %v68, %v66
    %v147 = vpack.c.bf16 %v69, %v67
    %v148 = vpack.c.bf16 %v72, %v70
    %v149 = vpack.c.bf16 %v73, %v71
    %v150 = vpack.c.bf16 %v76, %v74
    %v151 = vpack.c.bf16 %v77, %v75
    %v152 = vpack.c.bf16 %v80, %v78
    %v153 = vpack.c.bf16 %v81, %v79
    %v154 = vpack.c.bf16 %v84, %v82
    %v155 = vpack.c.bf16 %v85, %v83
    %v156 = vpack.c.bf16 %v88, %v86
    %v157 = vpack.c.bf16 %v89, %v87
    %v158 = vpack.c.bf16 %v92, %v90
    %v159 = vpack.c.bf16 %v93, %v91
    %v160 = vpack.c.bf16 %v96, %v94
    %v161 = vpack.c.bf16 %v97, %v95
    %v162 = vpack.c.bf16 %v100, %v98
    %v163 = vpack.c.bf16 %v101, %v99
    %v164 = vpack.c.bf16 %v104, %v102
    %v165 = vpack.c.bf16 %v105, %v103
    %v166 = vpack.c.bf16 %v108, %v106
    %v167 = vpack.c.bf16 %v109, %v107
    %v168 = vpack.c.bf16 %v112, %v110
    %v169 = vpack.c.bf16 %v113, %v111
    %v170 = vpack.c.bf16 %v116, %v114
    %v171 = vpack.c.bf16 %v117, %v115
    %v172 = vpack.c.bf16 %v120, %v118
    %v173 = vpack.c.bf16 %v121, %v119
    %v174 = vpack.c.bf16 %v124, %v122
    %v175 = vpack.c.bf16 %v125, %v123
    %v176 = vpack.c.bf16 %v128, %v126
    %v177 = vpack.c.bf16 %v129, %v127
    %178 = vmatpush.bf16.msra.mxu0 %v144
    %179 = vmatpush.bf16.msra.mxu0 %v142
    %180 = vmatpush.bf16.msra.mxu0 %v140
    %181 = vmatpush.bf16.msra.mxu0 %v138
    %182 = vmatpush.bf16.msra.mxu0 %v136
    %183 = vmatpush.bf16.msra.mxu0 %v134
    %184 = vmatpush.bf16.msra.mxu0 %v132
    %185 = vmatpush.bf16.msra.mxu0 %v130
    %186 = vmatmul.bf16.gmra.mxu0 %v28
    %v187 = vpop.f32.mrf.mxu0
    %v188 = vadd.f32 0.0, %v187
    %v189 = vpop.f32.mrf.mxu0
    %v190 = vadd.f32 0.0, %v189
    %191 = vmatmul.bf16.gmra.mxu0 %v31
    %v192 = vpop.f32.mrf.mxu0
    %v193 = vadd.f32 0.0, %v192
    %v194 = vpop.f32.mrf.mxu0
    %v195 = vadd.f32 0.0, %v194
    %196 = vdwg.mxu0
    %197 = vmatpush.bf16.msra.mxu0 %v160
    %198 = vmatpush.bf16.msra.mxu0 %v158
    %199 = vmatpush.bf16.msra.mxu0 %v156
    %200 = vmatpush.bf16.msra.mxu0 %v154
    %201 = vmatpush.bf16.msra.mxu0 %v152
    %202 = vmatpush.bf16.msra.mxu0 %v150
    %203 = vmatpush.bf16.msra.mxu0 %v148
    %204 = vmatpush.bf16.msra.mxu0 %v146
    %205 = vmatmul.bf16.gmra.mxu0 %v29
    %v206 = vpop.f32.mrf.mxu0
    %v207 = vadd.f32 %v188, %v206
    %v208 = vpop.f32.mrf.mxu0
    %v209 = vadd.f32 %v190, %v208
    %210 = vmatmul.bf16.gmra.mxu0 %v32
    %v211 = vpop.f32.mrf.mxu0
    %v212 = vadd.f32 %v193, %v211
    %v213 = vpop.f32.mrf.mxu0
    %v214 = vadd.f32 %v195, %v213
    %215 = vdwg.mxu0
    %216 = vmatpush.bf16.msra.mxu0 %v176
    %217 = vmatpush.bf16.msra.mxu0 %v174
    %218 = vmatpush.bf16.msra.mxu0 %v172
    %219 = vmatpush.bf16.msra.mxu0 %v170
    %220 = vmatpush.bf16.msra.mxu0 %v168
    %221 = vmatpush.bf16.msra.mxu0 %v166
    %222 = vmatpush.bf16.msra.mxu0 %v164
    %223 = vmatpush.bf16.msra.mxu0 %v162
    %224 = vmatmul.bf16.gmra.mxu0 %v30
    %v225 = vpop.f32.mrf.mxu0
    %v226 = vadd.f32 %v207, %v225
    %v227 = vpop.f32.mrf.mxu0
    %v228 = vadd.f32 %v209, %v227
    %229 = vmatmul.bf16.gmra.mxu0 %v33
    %v230 = vpop.f32.mrf.mxu0
    %v231 = vadd.f32 %v212, %v230
    %v232 = vpop.f32.mrf.mxu0
    %v233 = vadd.f32 %v214, %v232
    %234 = vdwg.mxu0
    %235 = vmatpush.bf16.msra.mxu0 %v145
    %236 = vmatpush.bf16.msra.mxu0 %v143
    %237 = vmatpush.bf16.msra.mxu0 %v141
    %238 = vmatpush.bf16.msra.mxu0 %v139
    %239 = vmatpush.bf16.msra.mxu0 %v137
    %240 = vmatpush.bf16.msra.mxu0 %v135
    %241 = vmatpush.bf16.msra.mxu0 %v133
    %242 = vmatpush.bf16.msra.mxu0 %v131
    %243 = vmatmul.bf16.gmra.mxu0 %v28
    %v244 = vpop.f32.mrf.mxu0
    %v245 = vadd.f32 0.0, %v244
    %v246 = vpop.f32.mrf.mxu0
    %v247 = vadd.f32 0.0, %v246
    %248 = vmatmul.bf16.gmra.mxu0 %v31
    %v249 = vpop.f32.mrf.mxu0
    %v250 = vadd.f32 0.0, %v249
    %v251 = vpop.f32.mrf.mxu0
    %v252 = vadd.f32 0.0, %v251
    %253 = vdwg.mxu0
    %254 = vmatpush.bf16.msra.mxu0 %v161
    %255 = vmatpush.bf16.msra.mxu0 %v159
    %256 = vmatpush.bf16.msra.mxu0 %v157
    %257 = vmatpush.bf16.msra.mxu0 %v155
    %258 = vmatpush.bf16.msra.mxu0 %v153
    %259 = vmatpush.bf16.msra.mxu0 %v151
    %260 = vmatpush.bf16.msra.mxu0 %v149
    %261 = vmatpush.bf16.msra.mxu0 %v147
    %262 = vmatmul.bf16.gmra.mxu0 %v29
    %v263 = vpop.f32.mrf.mxu0
    %v264 = vadd.f32 %v245, %v263
    %v265 = vpop.f32.mrf.mxu0
    %v266 = vadd.f32 %v247, %v265
    %267 = vmatmul.bf16.gmra.mxu0 %v32
    %v268 = vpop.f32.mrf.mxu0
    %v269 = vadd.f32 %v250, %v268
    %v270 = vpop.f32.mrf.mxu0
    %v271 = vadd.f32 %v252, %v270
    %272 = vdwg.mxu0
    %273 = vmatpush.bf16.msra.mxu0 %v177
    %274 = vmatpush.bf16.msra.mxu0 %v175
    %275 = vmatpush.bf16.msra.mxu0 %v173
    %276 = vmatpush.bf16.msra.mxu0 %v171
    %277 = vmatpush.bf16.msra.mxu0 %v169
    %278 = vmatpush.bf16.msra.mxu0 %v167
    %279 = vmatpush.bf16.msra.mxu0 %v165
    %280 = vmatpush.bf16.msra.mxu0 %v163
    %281 = vmatmul.bf16.gmra.mxu0 %v30
    %v282 = vpop.f32.mrf.mxu0
    %v283 = vadd.f32 %v264, %v282
    %v284 = vpop.f32.mrf.mxu0
    %v285 = vadd.f32 %v266, %v284
    %286 = vmatmul.bf16.gmra.mxu0 %v33
    %v287 = vpop.f32.mrf.mxu0
    %v288 = vadd.f32 %v269, %v287
    %v289 = vpop.f32.mrf.mxu0
    %v290 = vadd.f32 %v271, %v289
    %291 = vdwg.mxu0
    %v292 = vpack.c.bf16 %v226, %v226
    %v293 = vpack.c.bf16 %v228, %v228
    %v294 = vpack.c.bf16 %v231, %v231
    %v295 = vpack.c.bf16 %v233, %v233
    %v296 = vpack.c.bf16 %v283, %v283
    %v297 = vpack.c.bf16 %v285, %v285
    %v298 = vpack.c.bf16 %v288, %v288
    %v299 = vpack.c.bf16 %v290, %v290
    %v302 = vunpack.c.l.b16 %v292
    %v303 = vunpack.c.l.b16 %v293
    %v304 = vpack.c.b16 %v303, %v302
    %305 = vrot.lane.b32.xlu0 %v304, 64
    %v306 = vpop.permute.xlu0 %305
    %vm307 = vcmask 523264
    %v309 = vsel %vm307, %v304, 0
    %v312 = vsel %vm307, %v306, 0
    %314 = vmatpush.bf16.xpose.msra.mxu0 0
    %315 = vmatpush.bf16.xpose.msra.mxu0 0
    %316 = vmatpush.bf16.xpose.msra.mxu0 0
    %317 = vmatpush.bf16.xpose.msra.mxu0 0
    %318 = vmatpush.bf16.xpose.msra.mxu0 0
    %319 = vmatpush.bf16.xpose.msra.mxu0 0
    %320 = vmatpush.bf16.xpose.msra.mxu0 0
    %321 = vmatpush.bf16.xpose.msra.mxu0 %v312
    %322 = vmatmul.bf16.gmra.mxu0 %v309
    %v323 = vpop.f32.mrf.mxu0
    %v324 = vadd.f32 0.0, %v323
    %v325 = vpop.f32.mrf.mxu0
    %v326 = vadd.f32 0.0, %v325
    %327 = vdwg.mxu0
    %v330 = vunpack.c.l.b16 %v294
    %v331 = vunpack.c.l.b16 %v295
    %v332 = vpack.c.b16 %v331, %v330
    %333 = vrot.lane.b32.xlu0 %v332, 64
    %v334 = vpop.permute.xlu0 %333
    %v336 = vsel %vm307, %v332, 0
    %v339 = vsel %vm307, %v334, 0
    %341 = vmatpush.bf16.xpose.msra.mxu0 0
    %342 = vmatpush.bf16.xpose.msra.mxu0 0
    %343 = vmatpush.bf16.xpose.msra.mxu0 0
    %344 = vmatpush.bf16.xpose.msra.mxu0 0
    %345 = vmatpush.bf16.xpose.msra.mxu0 0
    %346 = vmatpush.bf16.xpose.msra.mxu0 0
    %347 = vmatpush.bf16.xpose.msra.mxu0 0
    %348 = vmatpush.bf16.xpose.msra.mxu0 %v339
    %349 = vmatmul.bf16.gmra.mxu0 %v336
    %v350 = vpop.f32.mrf.mxu0
    %v351 = vadd.f32 0.0, %v350
    %v352 = vpop.f32.mrf.mxu0
    %v353 = vadd.f32 0.0, %v352
    %354 = vdwg.mxu0
    %v355 = vmul.f32 %v324, 0.125
    %v356 = vmul.f32 %v326, 0.125
    %v357 = vmul.f32 %v351, 0.125
    %v358 = vmul.f32 %v353, 0.125
    %v359 = vlaneseq
    %v360 = vshrl.u32 %v359, 7
    %v361 = vadd.s32 %v360, 8
    %v362 = vlaneseq
    %v363 = vand.u32 %v362, 127
    %vm364 = vcmp.le.s32.totalorder %v363, %v360
    %vm365 = vcmp.le.s32.totalorder %v363, %v361
    %v366 = vsel %vm364, 1, 0
    %v367 = vsel %vm365, 1, 0
    %vm368 = vcmp.eq.s32.totalorder %v366, 1
    %vm369 = vcmp.eq.s32.totalorder %v367, 1
    %v370 = vsel %vm368, %v355, -inf
    %v371 = vsel %vm369, %v356, -inf
    %v372 = vsel %vm368, %v357, -inf
    %v373 = vsel %vm369, %v358, -inf
    %vm374 = vcmask 130048
    %v375 = vsel %vm374, %v370, -inf
    %376 = vmax.xlane.f32.xlu0 %v375
    %v377 = vpop.xlane.xlu0 %376
    %v378 = vsel %vm374, %v371, -inf
    %379 = vmax.xlane.f32.xlu0 %v378
    %v380 = vpop.xlane.xlu0 %379
    %v381 = vsel %vm374, %v372, -inf
    %382 = vmax.xlane.f32.xlu0 %v381
    %v383 = vpop.xlane.xlu0 %382
    %v384 = vsel %vm374, %v373, -inf
    %385 = vmax.xlane.f32.xlu0 %v384
    %v386 = vpop.xlane.xlu0 %385
    %v387 = vsub.f32 %v370, %v377
    %v388 = vsub.f32 %v371, %v380
    %v389 = vsub.f32 %v372, %v383
    %v390 = vsub.f32 %v373, %v386
    %v391 = vmul.f32 %v387, 1.442695
    %v392 = vpow.pop %v391
    %v393 = vmul.f32 %v388, 1.442695
    %v394 = vpow.pop %v393
    %v395 = vmul.f32 %v389, 1.442695
    %v396 = vpow.pop %v395
    %v397 = vmul.f32 %v390, 1.442695
    %v398 = vpow.pop %v397
    %v399 = vsel %vm374, %v392, 0.0
    %400 = vadd.xlane.f32.xlu0 %v399
    %v401 = vpop.xlane.xlu0 %400
    %v402 = vsel %vm374, %v394, 0.0
    %403 = vadd.xlane.f32.xlu0 %v402
    %v404 = vpop.xlane.xlu0 %403
    %v405 = vsel %vm374, %v396, 0.0
    %406 = vadd.xlane.f32.xlu0 %v405
    %v407 = vpop.xlane.xlu0 %406
    %v408 = vsel %vm374, %v398, 0.0
    %409 = vadd.xlane.f32.xlu0 %v408
    %v410 = vpop.xlane.xlu0 %409
    %v411 = vrcp.pop %v401
    %v412 = vmul.f32 %v401, %v411
    %v413 = vsub.f32 1.0, %v412
    %v414 = vmul.f32 %v411, %v413
    %v415 = vadd.f32 %v411, %v414
    %vm416 = vweird.f32 %v401
    %vm417 = vweird.f32 %v411
    %vm418 = vmor %vm416, %vm417
    %v419 = vsel %vm418, %v411, %v415
    %v420 = vand.u32 2147483647, %v401
    %vm421 = vcmp.eq.f32.partialorder %v420, 8.507059e+37
    %v422 = vand.u32 %v401, 2147483648
    %v423 = vor.u32 1.1754944e-38, %v422
    %v424 = vsel %vm421, %v423, %v419
    %v425 = vmul.f32 %v392, %v424
    %v426 = vrcp.pop %v404
    %v427 = vmul.f32 %v404, %v426
    %v428 = vsub.f32 1.0, %v427
    %v429 = vmul.f32 %v426, %v428
    %v430 = vadd.f32 %v426, %v429
    %vm431 = vweird.f32 %v404
    %vm432 = vweird.f32 %v426
    %vm433 = vmor %vm431, %vm432
    %v434 = vsel %vm433, %v426, %v430
    %v435 = vand.u32 2147483647, %v404
    %vm436 = vcmp.eq.f32.partialorder %v435, 8.507059e+37
    %v437 = vand.u32 %v404, 2147483648
    %v438 = vor.u32 1.1754944e-38, %v437
    %v439 = vsel %vm436, %v438, %v434
    %v440 = vmul.f32 %v394, %v439
    %v441 = vrcp.pop %v407
    %v442 = vmul.f32 %v407, %v441
    %v443 = vsub.f32 1.0, %v442
    %v444 = vmul.f32 %v441, %v443
    %v445 = vadd.f32 %v441, %v444
    %vm446 = vweird.f32 %v407
    %vm447 = vweird.f32 %v441
    %vm448 = vmor %vm446, %vm447
    %v449 = vsel %vm448, %v441, %v445
    %v450 = vand.u32 2147483647, %v407
    %vm451 = vcmp.eq.f32.partialorder %v450, 8.507059e+37
    %v452 = vand.u32 %v407, 2147483648
    %v453 = vor.u32 1.1754944e-38, %v452
    %v454 = vsel %vm451, %v453, %v449
    %v455 = vmul.f32 %v396, %v454
    %v456 = vrcp.pop %v410
    %v457 = vmul.f32 %v410, %v456
    %v458 = vsub.f32 1.0, %v457
    %v459 = vmul.f32 %v456, %v458
    %v460 = vadd.f32 %v456, %v459
    %vm461 = vweird.f32 %v410
    %vm462 = vweird.f32 %v456
    %vm463 = vmor %vm461, %vm462
    %v464 = vsel %vm463, %v456, %v460
    %v465 = vand.u32 2147483647, %v410
    %vm466 = vcmp.eq.f32.partialorder %v465, 8.507059e+37
    %v467 = vand.u32 %v410, 2147483648
    %v468 = vor.u32 1.1754944e-38, %v467
    %v469 = vsel %vm466, %v468, %v464
    %v470 = vmul.f32 %v398, %v469
    %v471 = vld [vmem:[%s2] sm:$0xff]
    %v472 = vld [vmem:[%s2 + $0x8] sm:$0xff]
    %v473 = vld [vmem:[%s2 + $0x10] sm:$0xff]
    %v474 = vld [vmem:[%s2 + $0x18] sm:$0xff]
    %vm475 = vcmp.ge.f32.partialorder %v471, 0.3
    %vm476 = vcmp.ge.f32.partialorder %v472, 0.3
    %vm477 = vcmp.ge.f32.partialorder %v473, 0.3
    %vm478 = vcmp.ge.f32.partialorder %v474, 0.3
    %v479 = vsel %vm475, %v425, 0.0
    %v480 = vsel %vm476, %v440, 0.0
    %v481 = vsel %vm477, %v455, 0.0
    %v482 = vsel %vm478, %v470, 0.0
    %v483 = vpack.c.bf16 %v479, %v479
    %v484 = vpack.c.bf16 %v480, %v480
    %v485 = vpack.c.bf16 %v481, %v481
    %v486 = vpack.c.bf16 %v482, %v482
    %v489 = vunpack.c.l.b16 %v483
    %v490 = vunpack.c.l.b16 %v484
    %v491 = vpack.c.b16 %v490, %v489
    %v494 = vunpack.c.l.b16 %v296
    %v495 = vunpack.c.l.b16 %v297
    %v496 = vpack.c.b16 %v495, %v494
    %v499 = vsel %vm374, %v491, 0
    %501 = vmatpush.bf16.msra.mxu0 0
    %502 = vmatpush.bf16.msra.mxu0 0
    %503 = vmatpush.bf16.msra.mxu0 0
    %504 = vmatpush.bf16.msra.mxu0 0
    %505 = vmatpush.bf16.msra.mxu0 0
    %506 = vmatpush.bf16.msra.mxu0 0
    %507 = vmatpush.bf16.msra.mxu0 0
    %508 = vmatpush.bf16.msra.mxu0 %v496
    %509 = vmatmul.bf16.gmra.mxu0 %v499
    %v510 = vpop.f32.mrf.mxu0
    %v511 = vadd.f32 0.0, %v510
    %v512 = vpop.f32.mrf.mxu0
    %v513 = vadd.f32 0.0, %v512
    %514 = vdwg.mxu0
    %v517 = vunpack.c.l.b16 %v485
    %v518 = vunpack.c.l.b16 %v486
    %v519 = vpack.c.b16 %v518, %v517
    %v522 = vunpack.c.l.b16 %v298
    %v523 = vunpack.c.l.b16 %v299
    %v524 = vpack.c.b16 %v523, %v522
    %v527 = vsel %vm374, %v519, 0
    %529 = vmatpush.bf16.msra.mxu0 0
    %530 = vmatpush.bf16.msra.mxu0 0
    %531 = vmatpush.bf16.msra.mxu0 0
    %532 = vmatpush.bf16.msra.mxu0 0
    %533 = vmatpush.bf16.msra.mxu0 0
    %534 = vmatpush.bf16.msra.mxu0 0
    %535 = vmatpush.bf16.msra.mxu0 0
    %536 = vmatpush.bf16.msra.mxu0 %v524
    %537 = vmatmul.bf16.gmra.mxu0 %v527
    %v538 = vpop.f32.mrf.mxu0
    %v539 = vadd.f32 0.0, %v538
    %v540 = vpop.f32.mrf.mxu0
    %v541 = vadd.f32 0.0, %v540
    %542 = vdwg.mxu0
    %v543 = vmul.f32 %v511, 1.4285715
    %v544 = vmul.f32 %v513, 1.4285715
    %v545 = vmul.f32 %v539, 1.4285715
    %v546 = vmul.f32 %v541, 1.4285715
    %547 = vst.msk [vmem:[#allocation2] sm:$0xff] %vm307, %v543
    %548 = vst.msk [vmem:[#allocation2 + $0x8] sm:$0xff] %vm307, %v544
    %549 = vst.msk [vmem:[#allocation2 + $0x10] sm:$0xff] %vm307, %v545
    %550 = vst.msk [vmem:[#allocation2 + $0x18] sm:$0xff] %vm307, %v546
    // Predicated region
    $region14: #{tpu_custom_call.1} parent=1 // pred_check
      _
    $region15: #{tpu_custom_call.1} parent=1 // pred_check_branch
      %552 = sbr.rel (0) target = $region17
    $region16: #{tpu_custom_call.1} parent=1 // pred_region
      %554 = vsyncadd [#allocation3], 0
      %s555 = sshll.u32 [#allocation2], 4
      %s556 = int_to_ptr.vmem [resolvable:$true] %s555
      %s557 = sshll.u32 %s3, 4
      %s558 = int_to_ptr.hbm [resolvable:$true] %s557
      %563 = dma.vmem_to_hbm [thread:$0]  %s556, 512, %s558, [#allocation3], 128, 128, 8
    $region17: #{tpu_custom_call.1} parent=1 // pred_fallthru
      _
    // Predicated region
    $region18: #{tpu_custom_call.1} parent=1 // pred_check
      _
    $region19: #{tpu_custom_call.1} parent=1 // pred_check_branch
      %565 = sbr.rel (0) target = $region21
    $region20: #{tpu_custom_call.1} parent=1 // pred_region
      %567 = dma.done [#allocation3], 512
    $region21: #{tpu_custom_call.1} parent=1 // pred_fallthru
      _
    %568 = vsyncpa [#allocation3], 1

</llo_original>
